<compile_context>
chip_gen: v7x
topology: tpu7x:2x2x1
jax: 0.10.0
libtpu: 0.0.40
codegen_flags: <defaults>
</compile_context>

<pallas_src>
import functools
import math

import numpy as np
import jax
import jax.numpy as jnp
from jax.experimental import pallas as pl
from jax.experimental.pallas import tpu as pltpu

EPSILON = 1e-10            # energy_floor default of Wav2Win
PREEMPH = 0.97             # preemph_coeff default
LOG_ENERGY_FLOOR = math.log(EPSILON)


def next_power_of_2(x: int) -> int:
    return 1 if x == 0 else 2 ** ((x - 1).bit_length())


def round_up(a: int, b: int) -> int:
    return ((a + b - 1) // b) * b


def povey_window(N: int) -> np.ndarray:
    # torch.hann_window(N, periodic=False) ** 0.85  (deterministic parameter)
    n = np.arange(N, dtype=np.float64)
    hann = 0.5 - 0.5 * np.cos(2.0 * np.pi * n / (N - 1))
    return hann ** 0.85


def frame_signal(x: jnp.ndarray, N: int, shift: int) -> jnp.ndarray:
    """snip_edges=False framing with reflected edges (plain-JAX glue).

    x: (B, num_samples) -> (B, T, N)
    """
    B, num_samples = x.shape
    T = (num_samples + shift // 2) // shift
    need = (T - 1) * shift + N
    npad = need - num_samples
    npad_left = (N - shift) // 2
    npad_right = npad - npad_left
    pad_left = jnp.flip(x[:, :npad_left], axis=1) if npad_left > 0 else x[:, :0]
    if npad_right > 0:
        pad_right = jnp.flip(x[:, num_samples - npad_right:], axis=1)
    else:
        pad_right = x[:, :0]
    xp = jnp.concatenate([pad_left, x, pad_right], axis=1)
    # npad_right < 0 (exotic length/shift combos) is handled by truncation,
    # matching the samples torch's as_strided actually reads.
    xp = xp[:, :need]
    idx = np.arange(T)[:, None] * shift + np.arange(N)[None, :]
    return xp[:, idx]  # (B, T, N)


def build_fused_op(N: int, nfft: int, K: int, Wout: int) -> np.ndarray:
    """Fused operator: DC removal -> pre-emphasis -> povey window -> rfft.

    Returns (N, Wout) float32 with
      cols [0:K)   = real-part basis
      cols [K:2K)  = imag-part basis        (col K is exactly 0: -sin(0))
      col  2K      = raw row-sum (ones)     (first moment for log energy)
      rest zero (lane padding to a multiple of 128).
    Zero padding of the frame up to fft_length is implicit (only N rows).
    """
    n = np.arange(N, dtype=np.float64)[:, None]
    k = np.arange(K, dtype=np.float64)[None, :]
    ang = 2.0 * np.pi * n * k / nfft
    CS = np.concatenate([np.cos(ang), -np.sin(ang)], axis=1)        # (N, 2K)
    win = povey_window(N)                                           # (N,)

    # Pre-emphasis with replicate left pad:  x_pre = P @ x
    P = np.eye(N, dtype=np.float64)
    P[np.arange(1, N), np.arange(N - 1)] = -PREEMPH
    P[0, 0] = 1.0 - PREEMPH
    # DC removal:  x_dc = D @ x,  D = I - (1/N) 11^T
    D = np.eye(N, dtype=np.float64) - 1.0 / N

    M = (P @ D).T @ (win[:, None] * CS)                             # (N, 2K)

    out = np.zeros((N, Wout), dtype=np.float64)
    out[:, :2 * K] = M
    out[:, 2 * K] = 1.0            # raw sum(x) column (no D/P/window applied)
    return out.astype(np.float32)


def wav2fft_kernel(frames_ref, dft_ref, out_ref, *, K, N):
    x = frames_ref[...]                                   # (tm, N) f32 raw frames
    xb = x.astype(dft_ref.dtype)                          # bf16 at MXU boundary only

    # One lane-dense MXU matmul: DC removal * pre-emphasis * povey window *
    # rfft (+ raw sum(x) in column 2K).  f32 accumulation.
    out_ref[...] = jnp.dot(xb, dft_ref[...],
                           preferred_element_type=jnp.float32)      # (tm, Wout)

    # Raw log energy (use_energy=True, raw_energy=True) from the two moments,
    # both accumulated on the MXU in f32 (operands bf16 -> ~0.3% moment error,
    # small vs. the log + floor; no XLU reductions, no (tm,N) subtract pass).
    xsq = (x * x).astype(dft_ref.dtype)                   # square in f32, cast once
    s2 = jnp.dot(xsq, dft_ref[:, 2 * K:2 * K + 1],
                 preferred_element_type=jnp.float32)      # (tm, 1)  sum(x^2)
    s1 = out_ref[:, 2 * K:2 * K + 1]                      # (tm, 1)  sum(x)
    energy = jnp.maximum(s2 - s1 * s1 * (1.0 / N), 0.0)   # guard cancellation
    log_e = jnp.maximum(jnp.log(energy + 1e-15), LOG_ENERGY_FLOOR)

    # real bin 0 <- log energy (sliced column store); imag bin 0 (column K) is
    # exactly 0 by construction, matching X[:, :, 0] = log_e.
    out_ref[:, 0:1] = log_e


def wav2fft(x, sampling_rate, frame_length=0.025, frame_shift=0.01,
            tm_max=1024, matmul_dtype=jnp.bfloat16, return_planar=False):
    """Pallas implementation of Wav2FFT.forward (dither=0, defaults otherwise)."""
    x = x.astype(jnp.float32)
    N = int(math.floor(frame_length * sampling_rate))
    shift = int(math.floor(frame_shift * sampling_rate))
    nfft = next_power_of_2(N)
    K = nfft // 2 + 1
    # Packed, lane-dense output: [0:K) re | [K:2K) im | 2K sum(x) | zero pad.
    Wout = round_up(2 * K + 1, 128)

    frames = frame_signal(x, N, shift)                    # (B, T, N)
    B, T, _ = frames.shape
    M = B * T

    # Large row tile (amortizes ~0.35us/step pipeline overhead), multiple of 8,
    # clamped so there are >= 2 grid steps whenever possible so both v7x
    # TensorCores get work on the ("parallel",) axis.
    tm = min(round_up(tm_max, 8), round_up(M, 8))
    if M > 8:
        tm = min(tm, round_up((M + 1) // 2, 8))
    Mpad = round_up(M, tm)

    flat = frames.reshape(M, N)
    if Mpad != M:
        flat = jnp.pad(flat, ((0, Mpad - M), (0, 0)))

    # Fused (DC removal * pre-emph * window * DFT) operator; bf16 at the matmul
    # boundary only (f32 accumulate).  Use matmul_dtype=jnp.float32 if closer
    # rfft parity than ~1e-2 relative is needed (kernel is HBM-bound anyway).
    dft = jnp.asarray(build_fused_op(N, nfft, K, Wout)).astype(matmul_dtype)

    kernel = functools.partial(wav2fft_kernel, K=K, N=N)

    # VMEM at tm=1024, N=400, Wout=640: ~9 MiB of double-buffered blocks plus a
    # few MiB of temporaries.  The explicit limit clears v5e's 16 MiB default
    # scoped window and stays well inside v7x's 64 MiB physical VMEM.
    out = pl.pallas_call(
        kernel,
        out_shape=jax.ShapeDtypeStruct((Mpad, Wout), jnp.float32),
        grid_spec=pltpu.PrefetchScalarGridSpec(
            num_scalar_prefetch=0,
            grid=(Mpad // tm,),
            in_specs=[pl.BlockSpec((tm, N), lambda i: (i, 0)),
                      pl.BlockSpec((N, Wout), lambda i: (0, 0))],
            out_specs=pl.BlockSpec((tm, Wout), lambda i: (i, 0))),
        compiler_params=pltpu.CompilerParams(
            dimension_semantics=("parallel",),
            vmem_limit_bytes=48 * 1024 * 1024),
    )(flat, dft)

    re = out[:M, :K].reshape(B, T, K)
    im = out[:M, K:2 * K].reshape(B, T, K)
    if return_planar:
        # Skips the complex64 assembly epilogue (two extra HBM passes) when the
        # downstream consumer can take planar real/imag.
        return re, im
    return jax.lax.complex(re, im)                        # complex64 (module parity)


def wav2fft_reference(x, sampling_rate, frame_length=0.025, frame_shift=0.01):
    """Pure-JAX reference mirroring the PyTorch forward semantics."""
    x = x.astype(jnp.float32)
    N = int(math.floor(frame_length * sampling_rate))
    shift = int(math.floor(frame_shift * sampling_rate))
    nfft = next_power_of_2(N)
    frames = frame_signal(x, N, shift)
    mu = jnp.mean(frames, axis=-1, keepdims=True)
    frames = frames - mu
    log_e = jnp.log(jnp.sum(frames ** 2, axis=-1) + 1e-15)
    log_e = jnp.maximum(log_e, math.log(EPSILON))
    prev = jnp.concatenate([frames[:, :, :1], frames[:, :, :-1]], axis=-1)
    frames = frames - PREEMPH * prev
    frames = frames * jnp.asarray(povey_window(N), dtype=jnp.float32)
    frames = jnp.pad(frames, ((0, 0), (0, 0), (0, nfft - N)))
    X = jnp.fft.rfft(frames, axis=-1)
    X = X.at[:, :, 0].set(log_e.astype(X.dtype))
    return X


if __name__ == "__main__":
    key = jax.random.PRNGKey(0)
    # Small, self-consistent config:
    #   sampling_rate=800 -> N=20 window samples, shift=8, fft_length=32, K=17
    #   num_samples=128   -> num_frames=16 per batch (snip_edges=False)
    B, num_samples, sampling_rate = 2, 128, 800
    x = jax.random.normal(key, (B, num_samples), dtype=jnp.float32)

    X = wav2fft(x, sampling_rate)
    X = jax.block_until_ready(X)

    X_ref = jax.block_until_ready(wav2fft_reference(x, sampling_rate))
    assert X.shape == X_ref.shape and X.dtype == jnp.complex64
    # bf16 matmul operands (f32 accumulate) + moment-based log energy:
    # tolerance covers the cast error.
    np.testing.assert_allclose(np.asarray(X), np.asarray(X_ref),
                               atol=5e-2, rtol=5e-2)
    print("KERNEL_OK")
</pallas_src>

<mosaic_0001>
module attributes {stable_mosaic.version = 11 : i64} {
  func.func @wav2fft_kernel(%arg0: i32, %arg1: memref<16x20xf32, #tpu.memory_space<vmem>>, %arg2: memref<20x128xbf16, #tpu.memory_space<vmem>>, %arg3: memref<16x128xf32, #tpu.memory_space<vmem>>) attributes {dimension_semantics = [#tpu.dimension_semantics<parallel>], iteration_bounds = array<i64: 2>, scalar_prefetch = 0 : i64, scratch_operands = 0 : i64, tpu.core_type = #tpu.core_type<tc>, window_params = [{transform_indices = @transform_0, window_bounds = array<i64: 16, 20>}, {pipeline_mode = #tpu.pipeline_mode<synchronous>, transform_indices = @transform_1, window_bounds = array<i64: 20, 128>}, {transform_indices = @transform_2, window_bounds = array<i64: 16, 128>}]} {
    %c0 = arith.constant 0 : index
    %c0_0 = arith.constant 0 : index
    %0 = vector.load %arg1[%c0, %c0_0] : memref<16x20xf32, #tpu.memory_space<vmem>>, vector<16x20xf32>
    %1 = arith.truncf %0 : vector<16x20xf32> to vector<16x20xbf16>
    %c0_1 = arith.constant 0 : index
    %c0_2 = arith.constant 0 : index
    %2 = vector.load %arg2[%c0_1, %c0_2] : memref<20x128xbf16, #tpu.memory_space<vmem>>, vector<20x128xbf16>
    %cst = arith.constant dense<0.000000e+00> : vector<16x128xf32>
    %3 = tpu.matmul %1, %2, %cst {dimension_numbers = #tpu.dot_dimension_numbers<[1], [0], [0], [1], [0, 0, 1, 1], [], []>} : vector<16x20xbf16>, vector<20x128xbf16>, vector<16x128xf32> -> vector<16x128xf32>
    %c0_3 = arith.constant 0 : index
    %c0_4 = arith.constant 0 : index
    %4 = vector.load %arg3[%c0_3, %c0_4] : memref<16x128xf32, #tpu.memory_space<vmem>>, vector<16x128xf32>
    tpu.vector_store %arg3[%c0_3, %c0_4], %3 {strides = array<i32>} : memref<16x128xf32, #tpu.memory_space<vmem>>, vector<16x128xf32>,
    %5 = arith.mulf %0, %0 : vector<16x20xf32>
    %6 = arith.truncf %5 : vector<16x20xf32> to vector<16x20xbf16>
    %c0_5 = arith.constant 0 : index
    %c34 = arith.constant 34 : index
    %7 = vector.load %arg2[%c0_5, %c34] : memref<20x128xbf16, #tpu.memory_space<vmem>>, vector<20x1xbf16>
    %cst_6 = arith.constant dense<0.000000e+00> : vector<16x1xf32>
    %8 = tpu.matmul %6, %7, %cst_6 {dimension_numbers = #tpu.dot_dimension_numbers<[1], [0], [0], [1], [0, 0, 1, 1], [], []>} : vector<16x20xbf16>, vector<20x1xbf16>, vector<16x1xf32> -> vector<16x1xf32>
    %c0_7 = arith.constant 0 : index
    %c34_8 = arith.constant 34 : index
    %9 = vector.load %arg3[%c0_7, %c34_8] : memref<16x128xf32, #tpu.memory_space<vmem>>, vector<16x1xf32>
    %10 = arith.mulf %9, %9 : vector<16x1xf32>
    %cst_9 = arith.constant 5.000000e-02 : f32
    %11 = vector.broadcast %cst_9 : f32 to vector<16x1xf32>
    %12 = arith.mulf %10, %11 : vector<16x1xf32>
    %13 = arith.subf %8, %12 : vector<16x1xf32>
    %cst_10 = arith.constant 0.000000e+00 : f32
    %14 = vector.broadcast %cst_10 : f32 to vector<16x1xf32>
    %15 = arith.maximumf %13, %14 : vector<16x1xf32>
    %cst_11 = arith.constant 1.000000e-15 : f32
    %16 = vector.broadcast %cst_11 : f32 to vector<16x1xf32>
    %17 = arith.addf %15, %16 : vector<16x1xf32>
    %18 = math.log %17 : vector<16x1xf32>
    %cst_12 = arith.constant -23.0258503 : f32
    %19 = vector.broadcast %cst_12 : f32 to vector<16x1xf32>
    %20 = arith.maximumf %18, %19 : vector<16x1xf32>
    %c0_13 = arith.constant 0 : index
    %c0_14 = arith.constant 0 : index
    %21 = vector.load %arg3[%c0_13, %c0_14] : memref<16x128xf32, #tpu.memory_space<vmem>>, vector<16x1xf32>
    tpu.vector_store %arg3[%c0_13, %c0_14], %20 {strides = array<i32>} : memref<16x128xf32, #tpu.memory_space<vmem>>, vector<16x1xf32>,
    return
  }
  func.func @transform_0(%arg0: i32) -> (i32, i32) {
    %c0_i32 = arith.constant 0 : i32
    %c0_i32_0 = arith.constant 0 : i32
    return %arg0, %c0_i32 : i32, i32
  }
  func.func @transform_1(%arg0: i32) -> (i32, i32) {
    %c0_i32 = arith.constant 0 : i32
    %c0_i32_0 = arith.constant 0 : i32
    %c0_i32_1 = arith.constant 0 : i32
    return %c0_i32, %c0_i32_0 : i32, i32
  }
  func.func @transform_2(%arg0: i32) -> (i32, i32) {
    %c0_i32 = arith.constant 0 : i32
    %c0_i32_0 = arith.constant 0 : i32
    return %arg0, %c0_i32 : i32, i32
  }
}

</mosaic_0001>

<llo_original>
// kernel: tpu_custom_call.1
$region0: #{tpu_custom_call.1}
  #allocation0 [shape = 'u32[]', space=smem, size = 0x4, offset = 0x4, fixed_abs, tag = 'smem constant byte address 0x4 - core index']
  #allocation1 [shape = 'u32[144,128]{1,0:T(1,128)}', space=vmem, size = 0x12000, scoped, tag = 'internal scratch']
  %s0 = inlined_call_operand.vmem [shape: f32[32,20], index: 0, kind: input, shape index: {}]
  %s1 = inlined_call_operand.vmem [shape: bf16[20,128], index: 1, kind: input, shape index: {}]
  %s2 = inlined_call_operand.hbm [shape: f32[32,128], index: 2, kind: output, shape index: {}]
  %s3 = sld [smem:[#allocation0]]
  $region41: #{tpu_custom_call.1} parent=0
    _
  %s5 = ssub.s32 1, %s3
  %s6 = scalar_select 0, %s5, %s3
  $region1: #{tpu_custom_call.1} parent=0
    #allocation2 [shape = 'u8[16384]{0}', space=vmem, size = 0x4000, scoped, tag = 'output window, operand 0']
    #allocation3 [shape = 's32[2]{0}', space=sflag, size = 0x8, scoped, tag = 'scoped memory for tpu_custom_call.1']
    %7 = vsyncpa [#allocation3], 0
    %s8 = scalar_lea.sflag [#allocation3], 1
    %9 = vsyncpa %s8, 0
    loop: start=0, step=1, limit=4
    $region2: #{tpu_custom_call.1} parent=1 // loop_pre_header
      _
    $region3: #{tpu_custom_call.1} parent=1 // loop_header
      %s11 = sphi 0, %s15
      %p12 = scmp.ge.s32.totalorder %s11, 4
      %s21 = sphi 0, %s23
      %s24 = sphi 0, %s21
      %s25 = sphi 0, %s24
      %s41 = sphi 0, %s25
      %s45 = sphi 0, %s45
      %s47 = sphi 0, %s45
      %s48 = sphi 0, %s47
      %s62 = sphi 0, %s48
      %s68 = sphi 0, %s70
      %s71 = sphi 0, %s68
      %s72 = sphi 0, %s71
      %s88 = sphi 0, %s72
    $region4: #{tpu_custom_call.1} parent=1 // loop_header_branch
      %14 = sbr.rel (%p12) target = $region8
    $region5: #{tpu_custom_call.1} parent=1 // loop_body
      %s16 = ssub.s32 %s11, 1
      %s17 = ssub.s32 %s11, 2
      %s18 = sadd.s32 %s11, 1
      %s19 = ssub.s32 %s11, %s18
      %p20 = scmp.eq.s32.totalorder %s19, 0
      %s22 = sadd.s32 %s21, 1
      %s23 = scalar_select %p20, %s21, %s22
      %p26 = pneg %p20
      %p27 = scmp.eq.s32.totalorder %s11, 1
      %p28 = por %p26, %p27
      %p29 = scmp.ne.s32.totalorder %s21, %s24
      %p30 = scmp.eq.s32.totalorder %s11, 0
      %p31 = por %p29, %p30
      %p32 = scmp.ne.s32.totalorder %s21, %s24
      %p33 = scmp.eq.s32.totalorder %s16, 1
      %p34 = por %p32, %p33
      %p35 = scmp.ne.s32.totalorder %s24, %s25
      %p36 = scmp.eq.s32.totalorder %s16, 0
      %p37 = por %p35, %p36
      %p38 = scmp.ne.s32.totalorder %s24, %s25
      %p39 = scmp.eq.s32.totalorder %s17, 1
      %p40 = por %p38, %p39
      %p42 = scmp.ne.s32.totalorder %s25, %s41
      %p43 = scmp.eq.s32.totalorder %s17, 0
      %p44 = por %p42, %p43
      %s46 = sadd.s32 %s45, 1
      %p49 = scmp.eq.s32.totalorder %s11, 1
      %p50 = scmp.ne.s32.totalorder %s45, %s47
      %p51 = scmp.eq.s32.totalorder %s11, 0
      %p52 = por %p50, %p51
      %p53 = scmp.ne.s32.totalorder %s45, %s47
      %p54 = scmp.eq.s32.totalorder %s16, 1
      %p55 = por %p53, %p54
      %p56 = scmp.ne.s32.totalorder %s47, %s48
      %p57 = scmp.eq.s32.totalorder %s16, 0
      %p58 = por %p56, %p57
      %p59 = scmp.ne.s32.totalorder %s47, %s48
      %p60 = scmp.eq.s32.totalorder %s17, 1
      %p61 = por %p59, %p60
      %p63 = scmp.ne.s32.totalorder %s48, %s62
      %p64 = scmp.eq.s32.totalorder %s17, 0
      %p65 = por %p63, %p64
      %s66 = ssub.s32 %s11, %s18
      %p67 = scmp.eq.s32.totalorder %s66, 0
      %s69 = sadd.s32 %s68, 1
      %s70 = scalar_select %p67, %s68, %s69
      %p73 = pneg %p67
      %p74 = scmp.eq.s32.totalorder %s11, 1
      %p75 = por %p73, %p74
      %p76 = scmp.ne.s32.totalorder %s68, %s71
      %p77 = scmp.eq.s32.totalorder %s11, 0
      %p78 = por %p76, %p77
      %p79 = scmp.ne.s32.totalorder %s68, %s71
      %p80 = scmp.eq.s32.totalorder %s16, 1
      %p81 = por %p79, %p80
      %p82 = scmp.ne.s32.totalorder %s71, %s72
      %p83 = scmp.eq.s32.totalorder %s16, 0
      %p84 = por %p82, %p83
      %p85 = scmp.ne.s32.totalorder %s71, %s72
      %p86 = scmp.eq.s32.totalorder %s17, 1
      %p87 = por %p85, %p86
      %p89 = scmp.ne.s32.totalorder %s72, %s88
      %p90 = scmp.eq.s32.totalorder %s17, 0
      %p91 = por %p89, %p90
      %p92 = scmp.le.s32.totalorder 1, %s11
      %p93 = scmp.lt.s32.totalorder %s11, 3
      %p94 = pnand %p92, %p93
      %p95 = pneg %p94
      // Predicated region
      $region9: #{tpu_custom_call.1} parent=5 // pred_check
        _
      $region10: #{tpu_custom_call.1} parent=5 // pred_check_branch
        %97 = sbr.rel (%p94) target = $region12
      $region11: #{tpu_custom_call.1} parent=5 // pred_region
        %s98 = ssub.s32 %s11, 1
        // Predicated region
        $region13: #{tpu_custom_call.1} parent=11 // pred_check
          %p99 = pneg %p58
        $region14: #{tpu_custom_call.1} parent=11 // pred_check_branch
          %101 = sbr.rel (%p99) target = $region16
        $region15: #{tpu_custom_call.1} parent=11 // pred_region
          _
        $region16: #{tpu_custom_call.1} parent=11 // pred_fallthru
          _
      $region12: #{tpu_custom_call.1} parent=5 // pred_fallthru
        _
      %p102 = scmp.lt.s32.totalorder %s11, 2
      // Predicated region
      $region17: #{tpu_custom_call.1} parent=5 // pred_check
        %p103 = pneg %p102
      $region18: #{tpu_custom_call.1} parent=5 // pred_check_branch
        %105 = sbr.rel (%p103) target = $region20
      $region19: #{tpu_custom_call.1} parent=5 // pred_region
        // Predicated region
        $region21: #{tpu_custom_call.1} parent=19 // pred_check
          %p106 = pneg %p31
        $region22: #{tpu_custom_call.1} parent=19 // pred_check_branch
          %108 = sbr.rel (%p106) target = $region24
        $region23: #{tpu_custom_call.1} parent=19 // pred_region
          %s109 = smul.u32 2, %s11
          %p110 = scmp.lt.s32.totalorder %s109, 3
          %s111 = scalar_select %p110, %s109, 3
          %s112 = smul.addr %s111, 8
          %s113 = scalar_lea.vmem %s0, %s112
          %s114 = smul.u32 2, %s11
        $region24: #{tpu_custom_call.1} parent=19 // pred_fallthru
          _
      $region20: #{tpu_custom_call.1} parent=5 // pred_fallthru
        _
      %p115 = scmp.le.s32.totalorder 1, %s11
      %p116 = scmp.lt.s32.totalorder %s11, 3
      %p117 = pnand %p115, %p116
      %p118 = pneg %p117
      // Predicated region
      $region25: #{tpu_custom_call.1} parent=5 // pred_check
        _
      $region26: #{tpu_custom_call.1} parent=5 // pred_check_branch
        %120 = sbr.rel (%p117) target = $region28
      $region27: #{tpu_custom_call.1} parent=5 // pred_region
        %s121 = ssub.s32 %s11, 1
        %s122 = smul.u32 2, %s16
        %p123 = scmp.lt.s32.totalorder %s122, 3
        %s124 = scalar_select %p123, %s122, 3
        %s125 = smul.addr %s124, 8
        %s126 = scalar_lea.vmem %s0, %s125
        %p127 = pneg %p37
        %p128 = pneg %p34
        %p129 = pneg %p58
        %p130 = pneg %p55
        %p131 = pneg %p84
        %p132 = pneg %p81
        %s133 = sand.u32 %s71, 1
        %s134 = scalar_lea.sflag [#allocation3], %s133
        %s135 = sand.u32 %s71, 1
        %s136 = smul.addr %s135, 16
        %s137 = scalar_lea.vmem [#allocation2], %s136
        %s138 = smul.u32 2, %s16
        %p139 = scmp.lt.s32.totalorder %s138, 3
        %s140 = scalar_select %p139, %s138, 3
        %s141 = smul.addr %s140, 8
        %s142 = scalar_lea.vmem %s0, %s141
        %s143 = smul.u32 2, %s16
        %s144 = smul.u32 2, %s16
        %v146 = vld [vmem:[%s142] sm:$0xff]
        %v147 = vld [vmem:[%s142 + $0x8] sm:$0xff]
        %v148 = vpack.c.bf16 %v147, %v146
        %v149 = vld [vmem:[%s1] sm:$0xf]
        %v150 = vld [vmem:[%s1 + $0x4] sm:$0xf]
        %v151 = vld [vmem:[%s1 + $0x8] sm:$0x3]
        %v155 = vunpack.c.l.b16 %v149
        %v156 = vunpack.c.l.b16 %v150
        %v157 = vunpack.c.l.b16 %v151
        %v158 = vpack.c.b16 %v156, %v155
        %v159 = vpack.c.b16 %v157, %v157
        %vm161 = vcmask 162816
        %v163 = vsel %vm161, %v148, 0
        %vm165 = vcmask 1041408
        %v167 = vsel %vm165, %v159, 0
        %169 = vmatprep.subr.bf16.mxu0 0
        %170 = vmatpush1.bf16.msra.mxu0 %v158
        %171 = vmatprep.subr.bf16.mxu0 0
        %172 = vmatpush1.bf16.msra.mxu0 %v167
        %173 = vmatprep.subr.bf16.mxu0 0
        %174 = vmatpush1.bf16.msra.mxu0 0
        %175 = vmatprep.subr.bf16.mxu0 0
        %176 = vmatpush1.bf16.msra.mxu0 0
        %177 = vmatprep.subr.bf16.mxu0 0
        %178 = vmatpush1.bf16.msra.mxu0 0
        %179 = vmatprep.subr.bf16.mxu0 0
        %180 = vmatpush1.bf16.msra.mxu0 0
        %181 = vmatprep.subr.bf16.mxu0 0
        %182 = vmatpush1.bf16.msra.mxu0 0
        %183 = vmatprep.subr.bf16.mxu0 0
        %184 = vmatpush1.bf16.msra.mxu0 0
        %185 = vmatprep.subr.bf16.mxu0 0
        %186 = vmatpush1.bf16.msra.mxu0 0
        %187 = vmatprep.subr.bf16.mxu0 0
        %188 = vmatpush1.bf16.msra.mxu0 0
        %189 = vmatprep.subr.bf16.mxu0 0
        %190 = vmatpush1.bf16.msra.mxu0 0
        %191 = vmatprep.subr.bf16.mxu0 0
        %192 = vmatpush1.bf16.msra.mxu0 0
        %193 = vmatprep.subr.bf16.mxu0 0
        %194 = vmatpush1.bf16.msra.mxu0 0
        %195 = vmatprep.subr.bf16.mxu0 0
        %196 = vmatpush1.bf16.msra.mxu0 0
        %197 = vmatprep.subr.bf16.mxu0 0
        %198 = vmatpush1.bf16.msra.mxu0 0
        %199 = vmatprep.subr.bf16.mxu0 0
        %200 = vmatpush1.bf16.msra.mxu0 0
        %201 = vmatprep.mubr.bf16.mxu0 0
        %202 = vmatmul.mubr.bf16.gmra.mrb[0].mxu0 %v163
        %v203 = vpop.f32.mrb[0].mxu0
        %v204 = vadd.f32 0.0, %v203
        %v205 = vpop.f32.mrb[0].mxu0
        %v206 = vpop.f32.mrb[0].mxu0
        %v207 = vadd.f32 0.0, %v206
        %v208 = vpop.f32.mrb[0].mxu0
        %209 = vdwg.mxu0
        %210 = vst [vmem:[%s137] sm:$0xff] %v204
        %211 = vst [vmem:[%s137 + $0x8] sm:$0xff] %v207
        %v212 = vmul.f32 %v146, %v146
        %v213 = vmul.f32 %v147, %v147
        %v214 = vpack.c.bf16 %v213, %v212
        %v215 = vld [vmem:[%s1] sm:$0xf]
        %v216 = vld [vmem:[%s1 + $0x4] sm:$0xf]
        %v217 = vld [vmem:[%s1 + $0x8] sm:$0x3]
        %v221 = vunpack.c.l.b16 %v215
        %v222 = vunpack.c.l.b16 %v216
        %v223 = vunpack.c.l.b16 %v217
        %v224 = vpack.c.b16 %v222, %v221
        %v225 = vpack.c.b16 %v223, %v223
        %226 = vrot.lane.b32.xlu0 %v224, 94
        %v227 = vpop.permute.xlu0 %226
        %228 = vrot.lane.b32.xlu0 %v225, 94
        %v229 = vpop.permute.xlu0 %228
        %v232 = vsel %vm161, %v214, 0
        %v235 = vsel %vm165, %v229, 0
        %237 = vmatprep.subr.bf16.mxu0 0
        %238 = vmatpush1.bf16.msra.mxu0 %v227
        %239 = vmatprep.subr.bf16.mxu0 0
        %240 = vmatpush1.bf16.msra.mxu0 %v235
        %241 = vmatprep.subr.bf16.mxu0 0
        %242 = vmatpush1.bf16.msra.mxu0 0
        %243 = vmatprep.subr.bf16.mxu0 0
        %244 = vmatpush1.bf16.msra.mxu0 0
        %245 = vmatprep.subr.bf16.mxu0 0
        %246 = vmatpush1.bf16.msra.mxu0 0
        %247 = vmatprep.subr.bf16.mxu0 0
        %248 = vmatpush1.bf16.msra.mxu0 0
        %249 = vmatprep.subr.bf16.mxu0 0
        %250 = vmatpush1.bf16.msra.mxu0 0
        %251 = vmatprep.subr.bf16.mxu0 0
        %252 = vmatpush1.bf16.msra.mxu0 0
        %253 = vmatprep.subr.bf16.mxu0 0
        %254 = vmatpush1.bf16.msra.mxu0 0
        %255 = vmatprep.subr.bf16.mxu0 0
        %256 = vmatpush1.bf16.msra.mxu0 0
        %257 = vmatprep.subr.bf16.mxu0 0
        %258 = vmatpush1.bf16.msra.mxu0 0
        %259 = vmatprep.subr.bf16.mxu0 0
        %260 = vmatpush1.bf16.msra.mxu0 0
        %261 = vmatprep.subr.bf16.mxu0 0
        %262 = vmatpush1.bf16.msra.mxu0 0
        %263 = vmatprep.subr.bf16.mxu0 0
        %264 = vmatpush1.bf16.msra.mxu0 0
        %265 = vmatprep.subr.bf16.mxu0 0
        %266 = vmatpush1.bf16.msra.mxu0 0
        %267 = vmatprep.subr.bf16.mxu0 0
        %268 = vmatpush1.bf16.msra.mxu0 0
        %269 = vmatprep.mubr.bf16.mxu0 0
        %270 = vmatmul.mubr.bf16.gmra.mrb[0].mxu0 %v232
        %v271 = vpop.f32.mrb[0].mxu0
        %v272 = vadd.f32 0.0, %v271
        %v273 = vpop.f32.mrb[0].mxu0
        %v274 = vpop.f32.mrb[0].mxu0
        %v275 = vadd.f32 0.0, %v274
        %v276 = vpop.f32.mrb[0].mxu0
        %277 = vdwg.mxu0
        %v278 = vld [vmem:[%s137] sm:$0xff]
        %v279 = vld [vmem:[%s137 + $0x8] sm:$0xff]
        %v280 = vmul.f32 %v278, %v278
        %v281 = vmul.f32 %v279, %v279
        %v282 = vmul.f32 %v280, 0.05
        %v283 = vmul.f32 %v281, 0.05
        %286 = vrot.lane.b32.xlu0 %v282, 94
        %v287 = vpop.permute.xlu0 %286
        %288 = vrot.lane.b32.xlu0 %v283, 94
        %v289 = vpop.permute.xlu0 %288
        %v292 = vsub.f32 %v272, %v287
        %v293 = vsub.f32 %v275, %v289
        %v294 = vmax.f32 %v292, 0.0
        %v295 = vmax.f32 %v293, 0.0
        %v296 = vadd.f32 %v294, 1e-15
        %v297 = vadd.f32 %v295, 1e-15
        %v298 = vlog2.pop %v296
        %v299 = vmul.f32 %v298, 0.6931472
        %v300 = vlog2.pop %v297
        %v301 = vmul.f32 %v300, 0.6931472
        %v302 = vmax.f32 %v299, -23.02585
        %v303 = vmax.f32 %v301, -23.02585
        %vm304 = vcmask 7168
        %305 = vst.msk [vmem:[%s137] sm:$0xff] %vm304, %v302
        %306 = vst.msk [vmem:[%s137 + $0x8] sm:$0xff] %vm304, %v303
        %s307 = sand.u32 %s71, 1
        %s308 = scalar_lea.sflag [#allocation3], %s307
        %s309 = sand.u32 %s71, 1
        %s310 = smul.addr %s309, 16
        %s311 = scalar_lea.vmem [#allocation2], %s310
        // Predicated region
        $region29: #{tpu_custom_call.1} parent=27 // pred_check
          %p312 = pneg %p81
        $region30: #{tpu_custom_call.1} parent=27 // pred_check_branch
          %314 = sbr.rel (%p312) target = $region32
        $region31: #{tpu_custom_call.1} parent=27 // pred_region
          %s315 = smul.u32 2, %s16
          %s317 = ssub.s32 256, 256
          %318 = vsyncadd %s308, %s317
          %s319 = smul.addr %s315, 128
          %s320 = scalar_lea.hbm %s2, %s319
          %s321 = sshll.u32 %s311, 4
          %s322 = int_to_ptr.vmem [resolvable:$true] %s321
          %327 = dma.vmem_to_hbm [thread:$0]  %s322, 256, %s320, %s308, 128, 128, 8
        $region32: #{tpu_custom_call.1} parent=27 // pred_fallthru
          _
      $region28: #{tpu_custom_call.1} parent=5 // pred_fallthru
        _
      %p328 = scmp.le.s32.totalorder 2, %s11
      // Predicated region
      $region33: #{tpu_custom_call.1} parent=5 // pred_check
        %p329 = pneg %p328
      $region34: #{tpu_custom_call.1} parent=5 // pred_check_branch
        %331 = sbr.rel (%p329) target = $region36
      $region35: #{tpu_custom_call.1} parent=5 // pred_region
        %s332 = ssub.s32 %s11, 2
        // Predicated region
        $region37: #{tpu_custom_call.1} parent=35 // pred_check
          %p333 = pneg %p87
        $region38: #{tpu_custom_call.1} parent=35 // pred_check_branch
          %335 = sbr.rel (%p333) target = $region40
        $region39: #{tpu_custom_call.1} parent=35 // pred_region
          %s336 = sand.u32 %s72, 1
          %s337 = scalar_lea.sflag [#allocation3], %s336
          %s338 = sand.u32 %s72, 1
          %s339 = smul.addr %s338, 16
          %s340 = scalar_lea.vmem [#allocation2], %s339
          %341 = dma.done %s337, 256
        $region40: #{tpu_custom_call.1} parent=35 // pred_fallthru
          _
      $region36: #{tpu_custom_call.1} parent=5 // pred_fallthru
        _
    $region6: #{tpu_custom_call.1} parent=1 // loop_footer
      %s15 = sadd.s32 1, %s11
    $region7: #{tpu_custom_call.1} parent=1 // loop_footer_branch
      %10 = sbr.rel target = $region3
    $region8: #{tpu_custom_call.1} parent=1 // loop_exit
      _
    %342 = vsyncpa [#allocation3], 1
    %s343 = scalar_lea.sflag [#allocation3], 1
    %344 = vsyncpa %s343, 1

</llo_original>
